<compile_context>
chip_gen: v7x
topology: tpu7x:2x2x1
jax: 0.10.0
libtpu: 0.0.40
codegen_flags: <defaults>
</compile_context>

<pallas_src>
import functools
import math

import jax
import jax.numpy as jnp
from jax.experimental import pallas as pl
from jax.experimental.pallas import tpu as pltpu


# ----------------------------------------------------------------------------
# In-kernel helpers
# ----------------------------------------------------------------------------
def _gelu_tanh(x):
    # tanh-form GELU: 0.5*x*(1 + tanh(sqrt(2/pi)*(x + 0.044715*x^3)))
    # TODO(synk): torch.nn.GELU() default is exact erf; tanh form differs by
    # ~1e-3 worst case but keeps the transcendental on the EUP slot.
    c = math.sqrt(2.0 / math.pi)
    return 0.5 * x * (1.0 + jnp.tanh(c * (x + 0.044715 * x * x * x)))


def _has_bf16_vpu():
    # bf16 VPU/EUP exists on v6e/v7x; v5e (and older) should do GELU in f32.
    try:
        kind = jax.devices()[0].device_kind.lower()
    except Exception:
        return False
    return ("v6" in kind) or ("v7" in kind)


# ----------------------------------------------------------------------------
# Fused FFN kernel: grid = (row_tiles, F_tiles); F is the reduction axis
# ----------------------------------------------------------------------------
def ffn_kernel(x_ref, w1T_ref, b1_ref, w2T_ref, b2_ref, o_ref, acc_ref,
               *, gelu_dtype):
    # x_ref  : [TM, D]            w1T_ref: [D, TF] bf16    b1_ref: [1, TF] f32
    # w2T_ref: [TF, D] bf16       b2_ref : [1, D]  f32
    # o_ref  : [TM, D] (x dtype)  acc_ref: [TM, D] f32 scratch
    f = pl.program_id(1)

    @pl.when(f == 0)
    def _():
        acc_ref[...] = jnp.zeros_like(acc_ref)

    x = x_ref[...].astype(jnp.bfloat16)          # MXU operands in bf16

    # fc1 slice (MXU, f32 accumulate) + bias (f32)
    h = jnp.dot(x, w1T_ref[...], preferred_element_type=jnp.float32)
    h = h + b1_ref[...]

    # GELU: bf16 math on v6e/v7x (halves VALU/EUP pressure), f32 on v5e.
    h = _gelu_tanh(h.astype(gelu_dtype))

    # dropout = identity (eval semantics)
    # TODO(synk): train-mode dropout would need pltpu.prng_seed/prng_random_bits.

    # fc2 slice (MXU) accumulated into the resident f32 scratch.
    acc_ref[...] += jnp.dot(h.astype(jnp.bfloat16), w2T_ref[...],
                            preferred_element_type=jnp.float32)

    @pl.when(f == pl.num_programs(1) - 1)
    def _():
        o_ref[...] = (acc_ref[...] + b2_ref[...]).astype(o_ref.dtype)


# ----------------------------------------------------------------------------
# Tile / budget selection
# ----------------------------------------------------------------------------
def _choose_row_tile(R, block_rows):
    """Returns (tm, pad_rows). Prefers a tile that divides R (no jnp.pad)."""
    block_rows = max(8, (block_rows // 8) * 8)
    if R <= block_rows:
        return R, 0                       # full rows: exempt from (8,128) rule
    lo = max(8, (block_rows // 4) // 8 * 8)
    for tm in range(block_rows, lo - 1, -8):
        if R % tm == 0:
            return tm, 0
    tm = block_rows
    return tm, (-R) % tm


def _choose_f_tile(F, block_f):
    """Largest multiple of 128 <= block_f that divides F, else full F."""
    if F <= block_f or F % 128 != 0:
        return F
    block_f = max(128, (block_f // 128) * 128)
    for tf in range(block_f, 127, -128):
        if F % tf == 0:
            return tf
    return F


def _vmem_limit_bytes(tm, D, tf, act_bytes, out_bytes):
    w_bytes = 2  # bf16 weights
    per_step = (tm * D * act_bytes        # x tile
                + tm * D * out_bytes      # out tile
                + D * tf * w_bytes        # w1T F-slice
                + tf * D * w_bytes        # w2T F-slice
                + (tf + D) * 4)           # biases
    need = 2 * per_step + tm * D * 4      # double-buffered pipeline + f32 acc
    budget = int(need * 1.5) + (4 << 20)  # compiler-scratch headroom
    # 56 MiB ceiling keeps the same config safe on v7x (64 MiB/TC); v5e/v6e
    # (128 MiB) never need more for these per-F-block tiles.
    return max(16 << 20, min(budget, 56 << 20))


# ----------------------------------------------------------------------------
# Parameter prep (call ONCE at load time -- hoisted out of the forward path)
# ----------------------------------------------------------------------------
def prepare_params(torch_params):
    """PyTorch-layout [out,in] weights -> transposed bf16 + f32 biases."""
    F = torch_params["fc1_w"].shape[0]
    D = torch_params["fc2_w"].shape[0]
    return dict(
        w1T=jnp.asarray(torch_params["fc1_w"]).T.astype(jnp.bfloat16),  # [D, F]
        b1=jnp.asarray(torch_params["fc1_b"]).reshape(1, F).astype(jnp.float32),
        w2T=jnp.asarray(torch_params["fc2_w"]).T.astype(jnp.bfloat16),  # [F, D]
        b2=jnp.asarray(torch_params["fc2_b"]).reshape(1, D).astype(jnp.float32),
    )


# ----------------------------------------------------------------------------
# Wrapper
# ----------------------------------------------------------------------------
def feed_forward(x, params, *, block_rows=512, block_f=1024):
    """x: [..., d_model] (f32 or bf16). params: output of prepare_params()."""
    orig_shape = x.shape
    D = orig_shape[-1]
    w1T, b1, w2T, b2 = params["w1T"], params["b1"], params["w2T"], params["b2"]
    F = w1T.shape[1]

    # Lane-dense row matrix (keep caller dtype; no forced f32 up-cast).
    # Note: for toy D < 128 the output stores are masked vst.msk; real models
    # with D >= 512 are lane-dense as-is.
    x2 = x.reshape(-1, D)
    R = x2.shape[0]

    tm, pad = _choose_row_tile(R, block_rows)
    if pad:
        x2 = jnp.pad(x2, ((0, pad), (0, 0)))
    rows = R + pad
    tf = _choose_f_tile(F, block_f)

    grid = (rows // tm, F // tf)
    gelu_dtype = jnp.bfloat16 if _has_bf16_vpu() else jnp.float32
    kernel = functools.partial(ffn_kernel, gelu_dtype=gelu_dtype)

    act_bytes = jnp.dtype(x.dtype).itemsize

    out = pl.pallas_call(
        kernel,
        out_shape=jax.ShapeDtypeStruct((rows, D), x.dtype),
        grid=grid,
        in_specs=[
            # Activation row tile: constant along F -> fetched once per row tile.
            pl.BlockSpec((tm, D), lambda i, f: (i, 0)),
            # fc1 / fc2 weight F-slices: streamed (double-buffered) along F.
            pl.BlockSpec((D, tf), lambda i, f: (0, f)),
            pl.BlockSpec((1, tf), lambda i, f: (0, f)),
            pl.BlockSpec((tf, D), lambda i, f: (f, 0)),
            # fc2 bias: constant index, tiny footprint.
            pl.BlockSpec((1, D), lambda i, f: (0, 0)),
        ],
        out_specs=pl.BlockSpec((tm, D), lambda i, f: (i, 0)),
        scratch_shapes=[pltpu.VMEM((tm, D), jnp.float32)],
        compiler_params=pltpu.CompilerParams(
            dimension_semantics=("parallel", "arbitrary"),
            vmem_limit_bytes=_vmem_limit_bytes(tm, D, tf, act_bytes, act_bytes),
        ),
    )(x2, w1T, b1, w2T, b2)

    if pad:
        out = out[:R]
    return out.reshape(orig_shape)


# ----------------------------------------------------------------------------
# Plain-JAX reference (takes the original PyTorch-layout f32 params)
# ----------------------------------------------------------------------------
def feed_forward_ref(x, torch_params):
    h = x @ torch_params["fc1_w"].T + torch_params["fc1_b"]
    h = _gelu_tanh(h)
    return h @ torch_params["fc2_w"].T + torch_params["fc2_b"]


if __name__ == "__main__":
    batch, seq, d_model, middle_dim = 2, 8, 32, 256

    key = jax.random.PRNGKey(0)
    k1, k2, k3, k4, k5 = jax.random.split(key, 5)

    x = jax.random.normal(k1, (batch, seq, d_model), jnp.float32)

    # torch.nn.Linear-style uniform init (bounds 1/sqrt(fan_in)), PyTorch layout.
    bound1 = 1.0 / math.sqrt(d_model)
    bound2 = 1.0 / math.sqrt(middle_dim)
    torch_params = dict(
        fc1_w=jax.random.uniform(k2, (middle_dim, d_model), jnp.float32,
                                 -bound1, bound1),
        fc1_b=jax.random.uniform(k3, (middle_dim,), jnp.float32,
                                 -bound1, bound1),
        fc2_w=jax.random.uniform(k4, (d_model, middle_dim), jnp.float32,
                                 -bound2, bound2),
        fc2_b=jax.random.uniform(k5, (d_model,), jnp.float32,
                                 -bound2, bound2),
    )

    # Weight prep happens once, outside the forward path.
    params = prepare_params(torch_params)
    ref = feed_forward_ref(x, torch_params)

    # Exercise the F-reduction axis: F=256 -> two 128-wide F blocks.
    out = jax.block_until_ready(feed_forward(x, params, block_rows=512, block_f=128))
    assert out.shape == (batch, seq, d_model), out.shape
    assert bool(jnp.all(jnp.isfinite(out)))
    assert bool(jnp.allclose(out, ref, atol=5e-2, rtol=5e-2))

    # Also exercise row tiling (two 8-row tiles, grid=(2,2)), same numerics.
    out2 = jax.block_until_ready(feed_forward(x, params, block_rows=8, block_f=128))
    assert bool(jnp.allclose(out2, ref, atol=5e-2, rtol=5e-2))

    print("KERNEL_OK")
</pallas_src>

<mosaic_0001>
module attributes {stable_mosaic.version = 11 : i64} {
  func.func @ffn_kernel(%arg0: i32, %arg1: i32, %arg2: memref<16x32xf32, #tpu.memory_space<vmem>>, %arg3: memref<32x128xbf16, #tpu.memory_space<vmem>>, %arg4: memref<1x128xf32, #tpu.memory_space<vmem>>, %arg5: memref<128x32xbf16, #tpu.memory_space<vmem>>, %arg6: memref<1x32xf32, #tpu.memory_space<vmem>>, %arg7: memref<16x32xf32, #tpu.memory_space<vmem>>, %arg8: memref<16x32xf32, #tpu.memory_space<vmem>>) attributes {dimension_semantics = [#tpu.dimension_semantics<parallel>, #tpu.dimension_semantics<arbitrary>], iteration_bounds = array<i64: 1, 2>, scalar_prefetch = 0 : i64, scratch_operands = 1 : i64, tpu.core_type = #tpu.core_type<tc>, window_params = [{transform_indices = @transform_0, window_bounds = array<i64: 16, 32>}, {transform_indices = @transform_1, window_bounds = array<i64: 32, 128>}, {transform_indices = @transform_2, window_bounds = array<i64: 1, 128>}, {transform_indices = @transform_3, window_bounds = array<i64: 128, 32>}, {pipeline_mode = #tpu.pipeline_mode<synchronous>, transform_indices = @transform_4, window_bounds = array<i64: 1, 32>}, {transform_indices = @transform_5, window_bounds = array<i64: 16, 32>}]} {
    %c0_i32 = arith.constant 0 : i32
    %0 = arith.cmpi eq, %arg1, %c0_i32 : i32
    %1 = arith.extui %0 : i1 to i32
    %c0_i32_0 = arith.constant 0 : i32
    %2 = arith.cmpi ne, %1, %c0_i32_0 : i32
    scf.if %2 {
      %cst_18 = arith.constant 0.000000e+00 : f32
      %32 = vector.broadcast %cst_18 : f32 to vector<16x32xf32>
      %c0_19 = arith.constant 0 : index
      %c0_20 = arith.constant 0 : index
      %33 = vector.load %arg8[%c0_19, %c0_20] : memref<16x32xf32, #tpu.memory_space<vmem>>, vector<16x32xf32>
      tpu.vector_store %arg8[%c0_19, %c0_20], %32 {strides = array<i32>} : memref<16x32xf32, #tpu.memory_space<vmem>>, vector<16x32xf32>,
    } else {
    }
    %c0 = arith.constant 0 : index
    %c0_1 = arith.constant 0 : index
    %3 = vector.load %arg2[%c0, %c0_1] : memref<16x32xf32, #tpu.memory_space<vmem>>, vector<16x32xf32>
    %4 = arith.truncf %3 : vector<16x32xf32> to vector<16x32xbf16>
    %c0_2 = arith.constant 0 : index
    %c0_3 = arith.constant 0 : index
    %5 = vector.load %arg3[%c0_2, %c0_3] : memref<32x128xbf16, #tpu.memory_space<vmem>>, vector<32x128xbf16>
    %cst = arith.constant dense<0.000000e+00> : vector<16x128xf32>
    %6 = tpu.matmul %4, %5, %cst {dimension_numbers = #tpu.dot_dimension_numbers<[1], [0], [0], [1], [0, 0, 1, 1], [], []>} : vector<16x32xbf16>, vector<32x128xbf16>, vector<16x128xf32> -> vector<16x128xf32>
    %c0_4 = arith.constant 0 : index
    %c0_5 = arith.constant 0 : index
    %7 = vector.load %arg4[%c0_4, %c0_5] : memref<1x128xf32, #tpu.memory_space<vmem>>, vector<1x128xf32>
    %8 = vector.broadcast %7 : vector<1x128xf32> to vector<16x128xf32>
    %9 = arith.addf %6, %8 : vector<16x128xf32>
    %cst_6 = arith.constant 5.000000e-01 : f32
    %10 = vector.broadcast %cst_6 : f32 to vector<16x128xf32>
    %11 = arith.mulf %10, %9 : vector<16x128xf32>
    %cst_7 = arith.constant 4.471500e-02 : f32
    %12 = vector.broadcast %cst_7 : f32 to vector<16x128xf32>
    %13 = arith.mulf %12, %9 : vector<16x128xf32>
    %14 = arith.mulf %13, %9 : vector<16x128xf32>
    %15 = arith.mulf %14, %9 : vector<16x128xf32>
    %16 = arith.addf %9, %15 : vector<16x128xf32>
    %cst_8 = arith.constant 0.797884583 : f32
    %17 = vector.broadcast %cst_8 : f32 to vector<16x128xf32>
    %18 = arith.mulf %17, %16 : vector<16x128xf32>
    %19 = math.tanh %18 : vector<16x128xf32>
    %cst_9 = arith.constant 1.000000e+00 : f32
    %20 = vector.broadcast %cst_9 : f32 to vector<16x128xf32>
    %21 = arith.addf %20, %19 : vector<16x128xf32>
    %22 = arith.mulf %11, %21 : vector<16x128xf32>
    %c0_10 = arith.constant 0 : index
    %c0_11 = arith.constant 0 : index
    %23 = vector.load %arg8[%c0_10, %c0_11] : memref<16x32xf32, #tpu.memory_space<vmem>>, vector<16x32xf32>
    %24 = arith.truncf %22 : vector<16x128xf32> to vector<16x128xbf16>
    %c0_12 = arith.constant 0 : index
    %c0_13 = arith.constant 0 : index
    %25 = vector.load %arg5[%c0_12, %c0_13] : memref<128x32xbf16, #tpu.memory_space<vmem>>, vector<128x32xbf16>
    %cst_14 = arith.constant dense<0.000000e+00> : vector<16x32xf32>
    %26 = tpu.matmul %24, %25, %cst_14 {dimension_numbers = #tpu.dot_dimension_numbers<[1], [0], [0], [1], [0, 0, 1, 1], [], []>} : vector<16x128xbf16>, vector<128x32xbf16>, vector<16x32xf32> -> vector<16x32xf32>
    %27 = arith.addf %23, %26 : vector<16x32xf32>
    %c0_15 = arith.constant 0 : index
    %c0_16 = arith.constant 0 : index
    %28 = vector.load %arg8[%c0_15, %c0_16] : memref<16x32xf32, #tpu.memory_space<vmem>>, vector<16x32xf32>
    tpu.vector_store %arg8[%c0_15, %c0_16], %27 {strides = array<i32>} : memref<16x32xf32, #tpu.memory_space<vmem>>, vector<16x32xf32>,
    %c1_i32 = arith.constant 1 : i32
    %29 = arith.cmpi eq, %arg1, %c1_i32 : i32
    %30 = arith.extui %29 : i1 to i32
    %c0_i32_17 = arith.constant 0 : i32
    %31 = arith.cmpi ne, %30, %c0_i32_17 : i32
    scf.if %31 {
      %c0_18 = arith.constant 0 : index
      %c0_19 = arith.constant 0 : index
      %32 = vector.load %arg8[%c0_18, %c0_19] : memref<16x32xf32, #tpu.memory_space<vmem>>, vector<16x32xf32>
      %c0_20 = arith.constant 0 : index
      %c0_21 = arith.constant 0 : index
      %33 = vector.load %arg6[%c0_20, %c0_21] : memref<1x32xf32, #tpu.memory_space<vmem>>, vector<1x32xf32>
      %34 = vector.broadcast %33 : vector<1x32xf32> to vector<16x32xf32>
      %35 = arith.addf %32, %34 : vector<16x32xf32>
      %c0_22 = arith.constant 0 : index
      %c0_23 = arith.constant 0 : index
      %36 = vector.load %arg7[%c0_22, %c0_23] : memref<16x32xf32, #tpu.memory_space<vmem>>, vector<16x32xf32>
      tpu.vector_store %arg7[%c0_22, %c0_23], %35 {strides = array<i32>} : memref<16x32xf32, #tpu.memory_space<vmem>>, vector<16x32xf32>,
    } else {
    }
    return
  }
  func.func @transform_0(%arg0: i32, %arg1: i32) -> (i32, i32) {
    %c0_i32 = arith.constant 0 : i32
    %c0_i32_0 = arith.constant 0 : i32
    return %arg0, %c0_i32 : i32, i32
  }
  func.func @transform_1(%arg0: i32, %arg1: i32) -> (i32, i32) {
    %c0_i32 = arith.constant 0 : i32
    %c0_i32_0 = arith.constant 0 : i32
    return %c0_i32, %arg1 : i32, i32
  }
  func.func @transform_2(%arg0: i32, %arg1: i32) -> (i32, i32) {
    %c0_i32 = arith.constant 0 : i32
    %c0_i32_0 = arith.constant 0 : i32
    return %c0_i32, %arg1 : i32, i32
  }
  func.func @transform_3(%arg0: i32, %arg1: i32) -> (i32, i32) {
    %c0_i32 = arith.constant 0 : i32
    %c0_i32_0 = arith.constant 0 : i32
    return %arg1, %c0_i32 : i32, i32
  }
  func.func @transform_4(%arg0: i32, %arg1: i32) -> (i32, i32) {
    %c0_i32 = arith.constant 0 : i32
    %c0_i32_0 = arith.constant 0 : i32
    %c0_i32_1 = arith.constant 0 : i32
    return %c0_i32, %c0_i32_0 : i32, i32
  }
  func.func @transform_5(%arg0: i32, %arg1: i32) -> (i32, i32) {
    %c0_i32 = arith.constant 0 : i32
    %c0_i32_0 = arith.constant 0 : i32
    return %arg0, %c0_i32 : i32, i32
  }
}

</mosaic_0001>

<llo_original>
// kernel: tpu_custom_call.1
$region0: #{tpu_custom_call.1}
  #allocation0 [shape = 'u32[]', space=smem, size = 0x4, offset = 0x4, fixed_abs, tag = 'smem constant byte address 0x4 - core index']
  #allocation1 [shape = 'u32[144,128]{1,0:T(1,128)}', space=vmem, size = 0x12000, scoped, tag = 'internal scratch']
  #allocation2 [shape = 'f32[16,32]{1,0:T(8,128)}', space=vmem, size = 0x2000, scoped, tag = 'scratch operand']
  %s0 = inlined_call_operand.vmem [shape: f32[16,32], index: 0, kind: input, shape index: {}]
  %s1 = inlined_call_operand.vmem [shape: bf16[32,256], index: 1, kind: input, shape index: {}]
  %s2 = inlined_call_operand.vmem [shape: f32[1,256], index: 2, kind: input, shape index: {}]
  %s3 = inlined_call_operand.vmem [shape: bf16[256,32], index: 3, kind: input, shape index: {}]
  %s4 = inlined_call_operand.vmem [shape: f32[1,32], index: 4, kind: input, shape index: {}]
  %s5 = inlined_call_operand.hbm [shape: f32[16,32], index: 5, kind: output, shape index: {}]
  %s6 = sld [smem:[#allocation0]]
  $region102: #{tpu_custom_call.1} parent=0
    _
  %s8 = ssub.s32 1, %s6
  %s9 = scalar_select 0, %s8, %s6
  $region1: #{tpu_custom_call.1} parent=0
    #allocation3 [shape = 'u8[16384]{0}', space=vmem, size = 0x4000, scoped, tag = 'input window, operand 1']
    #allocation4 [shape = 'u8[8192]{0}', space=vmem, size = 0x2000, scoped, tag = 'output window, operand 0, single buffered']
    #allocation5 [shape = 's32[2]{0}', space=sflag, size = 0x8, scoped, tag = 'scoped memory for tpu_custom_call.1']
    %10 = vsyncpa [#allocation5], 0
    loop: start=0, step=1, limit=4
    $region2: #{tpu_custom_call.1} parent=1 // loop_pre_header
      _
    $region3: #{tpu_custom_call.1} parent=1 // loop_header
      %s12 = sphi 0, %s16
      %p13 = scmp.ge.s32.totalorder %s12, 4
      %s19 = sphi 0, %s31
      %s20 = sphi 0, %s27
      %s21 = sphi 0, %s19
      %s22 = sphi 0, %s20
      %s23 = sphi 0, %s21
      %s24 = sphi 0, %s22
      %s34 = sphi 0, %s36
      %s37 = sphi 0, %s34
      %s38 = sphi 0, %s37
      %s54 = sphi 0, %s38
      %s60 = sphi 0, %s62
      %s63 = sphi 0, %s60
      %s64 = sphi 0, %s63
      %s80 = sphi 0, %s64
      %s86 = sphi 0, %s88
      %s89 = sphi 0, %s86
      %s90 = sphi 0, %s89
      %s106 = sphi 0, %s90
      %s112 = sphi 0, %s114
      %s115 = sphi 0, %s112
      %s116 = sphi 0, %s115
      %s132 = sphi 0, %s116
      %s136 = sphi 0, %s136
      %s138 = sphi 0, %s136
      %s139 = sphi 0, %s138
      %s153 = sphi 0, %s139
      %s159 = sphi 0, %s161
      %s162 = sphi 0, %s159
      %s163 = sphi 0, %s162
      %s179 = sphi 0, %s163
    $region4: #{tpu_custom_call.1} parent=1 // loop_header_branch
      %15 = sbr.rel (%p13) target = $region8
    $region5: #{tpu_custom_call.1} parent=1 // loop_body
      %s17 = ssub.s32 %s12, 1
      %s18 = ssub.s32 %s12, 2
      %s25 = sadd.s32 1, %s20
      %p26 = scmp.ge.s32.totalorder %s25, 2
      %s27 = scalar_select %p26, 0, %s25
      %s28 = sadd.s32 1, %s19
      %s29 = scalar_select %p26, %s28, %s19
      %p30 = scmp.ge.s32.totalorder %s29, 1
      %s31 = scalar_select %p30, 0, %s29
      %s32 = ssub.s32 %s19, %s31
      %p33 = scmp.eq.s32.totalorder %s32, 0
      %s35 = sadd.s32 %s34, 1
      %s36 = scalar_select %p33, %s34, %s35
      %p39 = pneg %p33
      %p40 = scmp.eq.s32.totalorder %s12, 1
      %p41 = por %p39, %p40
      %p42 = scmp.ne.s32.totalorder %s34, %s37
      %p43 = scmp.eq.s32.totalorder %s12, 0
      %p44 = por %p42, %p43
      %p45 = scmp.ne.s32.totalorder %s34, %s37
      %p46 = scmp.eq.s32.totalorder %s17, 1
      %p47 = por %p45, %p46
      %p48 = scmp.ne.s32.totalorder %s37, %s38
      %p49 = scmp.eq.s32.totalorder %s17, 0
      %p50 = por %p48, %p49
      %p51 = scmp.ne.s32.totalorder %s37, %s38
      %p52 = scmp.eq.s32.totalorder %s18, 1
      %p53 = por %p51, %p52
      %p55 = scmp.ne.s32.totalorder %s38, %s54
      %p56 = scmp.eq.s32.totalorder %s18, 0
      %p57 = por %p55, %p56
      %s58 = ssub.s32 %s20, %s27
      %p59 = scmp.eq.s32.totalorder %s58, 0
      %s61 = sadd.s32 %s60, 1
      %s62 = scalar_select %p59, %s60, %s61
      %p65 = pneg %p59
      %p66 = scmp.eq.s32.totalorder %s12, 1
      %p67 = por %p65, %p66
      %p68 = scmp.ne.s32.totalorder %s60, %s63
      %p69 = scmp.eq.s32.totalorder %s12, 0
      %p70 = por %p68, %p69
      %p71 = scmp.ne.s32.totalorder %s60, %s63
      %p72 = scmp.eq.s32.totalorder %s17, 1
      %p73 = por %p71, %p72
      %p74 = scmp.ne.s32.totalorder %s63, %s64
      %p75 = scmp.eq.s32.totalorder %s17, 0
      %p76 = por %p74, %p75
      %p77 = scmp.ne.s32.totalorder %s63, %s64
      %p78 = scmp.eq.s32.totalorder %s18, 1
      %p79 = por %p77, %p78
      %p81 = scmp.ne.s32.totalorder %s64, %s80
      %p82 = scmp.eq.s32.totalorder %s18, 0
      %p83 = por %p81, %p82
      %s84 = ssub.s32 %s20, %s27
      %p85 = scmp.eq.s32.totalorder %s84, 0
      %s87 = sadd.s32 %s86, 1
      %s88 = scalar_select %p85, %s86, %s87
      %p91 = pneg %p85
      %p92 = scmp.eq.s32.totalorder %s12, 1
      %p93 = por %p91, %p92
      %p94 = scmp.ne.s32.totalorder %s86, %s89
      %p95 = scmp.eq.s32.totalorder %s12, 0
      %p96 = por %p94, %p95
      %p97 = scmp.ne.s32.totalorder %s86, %s89
      %p98 = scmp.eq.s32.totalorder %s17, 1
      %p99 = por %p97, %p98
      %p100 = scmp.ne.s32.totalorder %s89, %s90
      %p101 = scmp.eq.s32.totalorder %s17, 0
      %p102 = por %p100, %p101
      %p103 = scmp.ne.s32.totalorder %s89, %s90
      %p104 = scmp.eq.s32.totalorder %s18, 1
      %p105 = por %p103, %p104
      %p107 = scmp.ne.s32.totalorder %s90, %s106
      %p108 = scmp.eq.s32.totalorder %s18, 0
      %p109 = por %p107, %p108
      %s110 = ssub.s32 %s20, %s27
      %p111 = scmp.eq.s32.totalorder %s110, 0
      %s113 = sadd.s32 %s112, 1
      %s114 = scalar_select %p111, %s112, %s113
      %p117 = pneg %p111
      %p118 = scmp.eq.s32.totalorder %s12, 1
      %p119 = por %p117, %p118
      %p120 = scmp.ne.s32.totalorder %s112, %s115
      %p121 = scmp.eq.s32.totalorder %s12, 0
      %p122 = por %p120, %p121
      %p123 = scmp.ne.s32.totalorder %s112, %s115
      %p124 = scmp.eq.s32.totalorder %s17, 1
      %p125 = por %p123, %p124
      %p126 = scmp.ne.s32.totalorder %s115, %s116
      %p127 = scmp.eq.s32.totalorder %s17, 0
      %p128 = por %p126, %p127
      %p129 = scmp.ne.s32.totalorder %s115, %s116
      %p130 = scmp.eq.s32.totalorder %s18, 1
      %p131 = por %p129, %p130
      %p133 = scmp.ne.s32.totalorder %s116, %s132
      %p134 = scmp.eq.s32.totalorder %s18, 0
      %p135 = por %p133, %p134
      %s137 = sadd.s32 %s136, 1
      %p140 = scmp.eq.s32.totalorder %s12, 1
      %p141 = scmp.ne.s32.totalorder %s136, %s138
      %p142 = scmp.eq.s32.totalorder %s12, 0
      %p143 = por %p141, %p142
      %p144 = scmp.ne.s32.totalorder %s136, %s138
      %p145 = scmp.eq.s32.totalorder %s17, 1
      %p146 = por %p144, %p145
      %p147 = scmp.ne.s32.totalorder %s138, %s139
      %p148 = scmp.eq.s32.totalorder %s17, 0
      %p149 = por %p147, %p148
      %p150 = scmp.ne.s32.totalorder %s138, %s139
      %p151 = scmp.eq.s32.totalorder %s18, 1
      %p152 = por %p150, %p151
      %p154 = scmp.ne.s32.totalorder %s139, %s153
      %p155 = scmp.eq.s32.totalorder %s18, 0
      %p156 = por %p154, %p155
      %s157 = ssub.s32 %s19, %s31
      %p158 = scmp.eq.s32.totalorder %s157, 0
      %s160 = sadd.s32 %s159, 1
      %s161 = scalar_select %p158, %s159, %s160
      %p164 = pneg %p158
      %p165 = scmp.eq.s32.totalorder %s12, 1
      %p166 = por %p164, %p165
      %p167 = scmp.ne.s32.totalorder %s159, %s162
      %p168 = scmp.eq.s32.totalorder %s12, 0
      %p169 = por %p167, %p168
      %p170 = scmp.ne.s32.totalorder %s159, %s162
      %p171 = scmp.eq.s32.totalorder %s17, 1
      %p172 = por %p170, %p171
      %p173 = scmp.ne.s32.totalorder %s162, %s163
      %p174 = scmp.eq.s32.totalorder %s17, 0
      %p175 = por %p173, %p174
      %p176 = scmp.ne.s32.totalorder %s162, %s163
      %p177 = scmp.eq.s32.totalorder %s18, 1
      %p178 = por %p176, %p177
      %p180 = scmp.ne.s32.totalorder %s163, %s179
      %p181 = scmp.eq.s32.totalorder %s18, 0
      %p182 = por %p180, %p181
      %p183 = scmp.le.s32.totalorder 1, %s12
      %p184 = scmp.lt.s32.totalorder %s12, 3
      %p185 = pnand %p183, %p184
      %p186 = pneg %p185
      // Predicated region
      $region9: #{tpu_custom_call.1} parent=5 // pred_check
        _
      $region10: #{tpu_custom_call.1} parent=5 // pred_check_branch
        %188 = sbr.rel (%p185) target = $region12
      $region11: #{tpu_custom_call.1} parent=5 // pred_region
        %s189 = ssub.s32 %s12, 1
        // Predicated region
        $region13: #{tpu_custom_call.1} parent=11 // pred_check
          %p190 = pneg %p50
        $region14: #{tpu_custom_call.1} parent=11 // pred_check_branch
          %192 = sbr.rel (%p190) target = $region16
        $region15: #{tpu_custom_call.1} parent=11 // pred_region
          %s193 = smul.u32 2, %s21
          %p194 = scmp.lt.s32.totalorder %s193, 1
          %s195 = scalar_select %p194, %s193, 1
          %s196 = smul.addr %s195, 8
          %s197 = scalar_lea.vmem %s0, %s196
          %s198 = smul.u32 2, %s21
        $region16: #{tpu_custom_call.1} parent=11 // pred_fallthru
          _
        // Predicated region
        $region17: #{tpu_custom_call.1} parent=11 // pred_check
          %p199 = pneg %p149
        $region18: #{tpu_custom_call.1} parent=11 // pred_check_branch
          %201 = sbr.rel (%p199) target = $region20
        $region19: #{tpu_custom_call.1} parent=11 // pred_region
          _
        $region20: #{tpu_custom_call.1} parent=11 // pred_fallthru
          _
      $region12: #{tpu_custom_call.1} parent=5 // pred_fallthru
        _
      %p202 = scmp.lt.s32.totalorder %s12, 2
      // Predicated region
      $region21: #{tpu_custom_call.1} parent=5 // pred_check
        %p203 = pneg %p202
      $region22: #{tpu_custom_call.1} parent=5 // pred_check_branch
        %205 = sbr.rel (%p203) target = $region24
      $region23: #{tpu_custom_call.1} parent=5 // pred_region
        // Predicated region
        $region25: #{tpu_custom_call.1} parent=23 // pred_check
          %p206 = pneg %p70
        $region26: #{tpu_custom_call.1} parent=23 // pred_check_branch
          %208 = sbr.rel (%p206) target = $region28
        $region27: #{tpu_custom_call.1} parent=23 // pred_region
          %s209 = sand.u32 %s60, 1
          %s210 = sand.u32 %s60, 1
          %s211 = smul.addr %s210, 16
          %s212 = scalar_lea.vmem [#allocation3], %s211
          %s213 = smul.addr %s20, 4
          %s214 = scalar_lea.vmem %s1, %s213
          // Predicated region
          $region29: #{tpu_custom_call.1} parent=27 // pred_check
            _
          $region30: #{tpu_custom_call.1} parent=27 // pred_check_branch
            %216 = sbr.rel (0) target = $region32
          $region31: #{tpu_custom_call.1} parent=27 // pred_region
            // Predicated region
            $region33: #{tpu_custom_call.1} parent=31 // pred_check
              _
            $region34: #{tpu_custom_call.1} parent=31 // pred_check_branch
              %218 = sbr.rel target = $region36
            $region35: #{tpu_custom_call.1} parent=31 // pred_region
              // Predicated region
              $region48: #{tpu_custom_call.1} parent=35 // pred_check
                _
              $region49: #{tpu_custom_call.1} parent=35 // pred_check_branch
                %239 = sbr.rel (0) target = $region51
              $region50: #{tpu_custom_call.1} parent=35 // pred_region
                loop: start=0, step=1, limit=1
                $region52: #{tpu_custom_call.1} parent=50 // loop_pre_header
                  _
                $region53: #{tpu_custom_call.1} parent=50 // loop_header
                  %s241 = sphi 0, %s245
                  %p242 = scmp.ge.s32.totalorder %s241, 1
                  %s246 = sphi %s214, %s214
                  %s247 = sphi %s212, %s212
                $region54: #{tpu_custom_call.1} parent=50 // loop_header_branch
                  %244 = sbr.rel (%p242) target = $region58
                $region55: #{tpu_custom_call.1} parent=50 // loop_body
                  _
                $region56: #{tpu_custom_call.1} parent=50 // loop_footer
                  %s245 = sadd.s32 1, %s241
                $region57: #{tpu_custom_call.1} parent=50 // loop_footer_branch
                  %240 = sbr.rel target = $region53
                $region58: #{tpu_custom_call.1} parent=50 // loop_exit
                  _
                loop: start=0, step=1, limit=1
                $region59: #{tpu_custom_call.1} parent=50 // loop_pre_header
                  _
                $region60: #{tpu_custom_call.1} parent=50 // loop_header
                  %s250 = sphi 0, %s254
                  %p251 = scmp.ge.s32.totalorder %s250, 1
                  %s255 = sphi %s214, %s214
                  %s256 = sphi %s212, %s212
                $region61: #{tpu_custom_call.1} parent=50 // loop_header_branch
                  %253 = sbr.rel (%p251) target = $region65
                $region62: #{tpu_custom_call.1} parent=50 // loop_body
                  %v257 = vld [vmem:[%s255] sm:$0xf]
                  %258 = vst [vmem:[%s256] sm:$0xf] %v257
                  %v259 = vld [vmem:[%s255 + $0x8] sm:$0xf]
                  %260 = vst [vmem:[%s256 + $0x4] sm:$0xf] %v259
                  %v261 = vld [vmem:[%s255 + $0x10] sm:$0xf]
                  %262 = vst [vmem:[%s256 + $0x8] sm:$0xf] %v261
                  %v263 = vld [vmem:[%s255 + $0x18] sm:$0xf]
                  %264 = vst [vmem:[%s256 + $0xc] sm:$0xf] %v263
                $region63: #{tpu_custom_call.1} parent=50 // loop_footer
                  %s254 = sadd.s32 1, %s250
                $region64: #{tpu_custom_call.1} parent=50 // loop_footer_branch
                  %249 = sbr.rel target = $region60
                $region65: #{tpu_custom_call.1} parent=50 // loop_exit
                  _
              $region51: #{tpu_custom_call.1} parent=35 // pred_fallthru
                _
            $region36: #{tpu_custom_call.1} parent=31 // pred_fallthru
              _
            // Predicated region
            $region37: #{tpu_custom_call.1} parent=31 // pred_check
              _
            $region38: #{tpu_custom_call.1} parent=31 // pred_check_branch
              %220 = sbr.rel (0) target = $region40
            $region39: #{tpu_custom_call.1} parent=31 // pred_region
              loop: start=0, step=1, limit=1
              $region41: #{tpu_custom_call.1} parent=39 // loop_pre_header
                _
              $region42: #{tpu_custom_call.1} parent=39 // loop_header
                %s223 = sphi 0, %s227
                %p224 = scmp.ge.s32.totalorder %s223, 1
                %s228 = sphi %s214, %s214
                %s229 = sphi %s212, %s212
              $region43: #{tpu_custom_call.1} parent=39 // loop_header_branch
                %226 = sbr.rel (%p224) target = $region47
              $region44: #{tpu_custom_call.1} parent=39 // loop_body
                %v230 = vld [vmem:[%s228] sm:$0xf]
                %231 = vst [vmem:[%s229] sm:$0xf] %v230
                %v232 = vld [vmem:[%s228 + $0x8] sm:$0xf]
                %233 = vst [vmem:[%s229 + $0x4] sm:$0xf] %v232
                %v234 = vld [vmem:[%s228 + $0x10] sm:$0xf]
                %235 = vst [vmem:[%s229 + $0x8] sm:$0xf] %v234
                %v236 = vld [vmem:[%s228 + $0x18] sm:$0xf]
                %237 = vst [vmem:[%s229 + $0xc] sm:$0xf] %v236
              $region45: #{tpu_custom_call.1} parent=39 // loop_footer
                %s227 = sadd.s32 1, %s223
              $region46: #{tpu_custom_call.1} parent=39 // loop_footer_branch
                %222 = sbr.rel target = $region42
              $region47: #{tpu_custom_call.1} parent=39 // loop_exit
                _
            $region40: #{tpu_custom_call.1} parent=31 // pred_fallthru
              _
          $region32: #{tpu_custom_call.1} parent=27 // pred_fallthru
            _
          %265 = vnop
        $region28: #{tpu_custom_call.1} parent=23 // pred_fallthru
          _
        // Predicated region
        $region66: #{tpu_custom_call.1} parent=23 // pred_check
          %p266 = pneg %p96
        $region67: #{tpu_custom_call.1} parent=23 // pred_check_branch
          %268 = sbr.rel (%p266) target = $region69
        $region68: #{tpu_custom_call.1} parent=23 // pred_region
          %p269 = scmp.lt.s32.totalorder %s20, 1
          %s270 = scalar_select %p269, %s20, 1
          %s271 = scalar_lea.vmem %s2, %s270
        $region69: #{tpu_custom_call.1} parent=23 // pred_fallthru
          _
        // Predicated region
        $region70: #{tpu_custom_call.1} parent=23 // pred_check
          %p272 = pneg %p122
        $region71: #{tpu_custom_call.1} parent=23 // pred_check_branch
          %274 = sbr.rel (%p272) target = $region73
        $region72: #{tpu_custom_call.1} parent=23 // pred_region
          %s275 = smul.u32 16, %s20
          %p276 = scmp.lt.s32.totalorder %s275, 31
          %s277 = scalar_select %p276, %s275, 31
          %s278 = smul.addr %s277, 4
          %s279 = scalar_lea.vmem %s3, %s278
          %s280 = smul.u32 16, %s20
        $region73: #{tpu_custom_call.1} parent=23 // pred_fallthru
          _
      $region24: #{tpu_custom_call.1} parent=5 // pred_fallthru
        _
      %p281 = scmp.le.s32.totalorder 1, %s12
      %p282 = scmp.lt.s32.totalorder %s12, 3
      %p283 = pnand %p281, %p282
      %p284 = pneg %p283
      // Predicated region
      $region74: #{tpu_custom_call.1} parent=5 // pred_check
        _
      $region75: #{tpu_custom_call.1} parent=5 // pred_check_branch
        %286 = sbr.rel (%p283) target = $region77
      $region76: #{tpu_custom_call.1} parent=5 // pred_region
        %s287 = ssub.s32 %s12, 1
        %s288 = sand.u32 %s63, 1
        %s289 = sand.u32 %s63, 1
        %s290 = smul.addr %s289, 16
        %s291 = scalar_lea.vmem [#allocation3], %s290
        // Predicated region
        $region78: #{tpu_custom_call.1} parent=76 // pred_check
          %p292 = pneg %p76
        $region79: #{tpu_custom_call.1} parent=76 // pred_check_branch
          %294 = sbr.rel (%p292) target = $region81
        $region80: #{tpu_custom_call.1} parent=76 // pred_region
          _
        $region81: #{tpu_custom_call.1} parent=76 // pred_fallthru
          _
        %s295 = smul.u32 2, %s21
        %p296 = scmp.lt.s32.totalorder %s295, 1
        %s297 = scalar_select %p296, %s295, 1
        %s298 = smul.addr %s297, 8
        %s299 = scalar_lea.vmem %s0, %s298
        %p300 = pneg %p50
        %p301 = pneg %p47
        %s302 = sand.u32 %s63, 1
        %s303 = sand.u32 %s63, 1
        %s304 = smul.addr %s303, 16
        %s305 = scalar_lea.vmem [#allocation3], %s304
        %p306 = pneg %p76
        %p307 = pneg %p73
        %p308 = scmp.lt.s32.totalorder %s22, 1
        %s309 = scalar_select %p308, %s22, 1
        %s310 = scalar_lea.vmem %s2, %s309
        %p311 = pneg %p102
        %p312 = pneg %p99
        %s313 = smul.u32 16, %s22
        %p314 = scmp.lt.s32.totalorder %s313, 31
        %s315 = scalar_select %p314, %s313, 31
        %s316 = smul.addr %s315, 4
        %s317 = scalar_lea.vmem %s3, %s316
        %p318 = pneg %p128
        %p319 = pneg %p125
        %p320 = pneg %p149
        %p321 = pneg %p146
        %p322 = pneg %p175
        %p323 = pneg %p172
        %s324 = smul.u32 2, %s21
        %p325 = scmp.lt.s32.totalorder %s324, 1
        %s326 = scalar_select %p325, %s324, 1
        %s327 = smul.addr %s326, 8
        %s328 = scalar_lea.vmem %s0, %s327
        %s329 = smul.u32 2, %s21
        %p330 = scmp.lt.s32.totalorder %s22, 1
        %s331 = scalar_select %p330, %s22, 1
        %s332 = scalar_lea.vmem %s2, %s331
        %s333 = smul.u32 16, %s22
        %p334 = scmp.lt.s32.totalorder %s333, 31
        %s335 = scalar_select %p334, %s333, 31
        %s336 = smul.addr %s335, 4
        %s337 = scalar_lea.vmem %s3, %s336
        %s338 = smul.u32 16, %s22
        %s339 = smul.u32 2, %s21
        %p341 = scmp.eq.s32.totalorder %s22, 0
        // Predicated region
        $region82: #{tpu_custom_call.1} parent=76 // pred_check
          %p342 = pneg %p341
        $region83: #{tpu_custom_call.1} parent=76 // pred_check_branch
          %344 = sbr.rel (%p342) target = $region85
        $region84: #{tpu_custom_call.1} parent=76 // pred_region
          %vm345 = vcmask 261120
          %346 = vst.msk [vmem:[#allocation2] sm:$0xff] %vm345, 0.0
          %347 = vst.msk [vmem:[#allocation2 + $0x8] sm:$0xff] %vm345, 0.0
        $region85: #{tpu_custom_call.1} parent=76 // pred_fallthru
          _
        %v348 = vld [vmem:[%s328] sm:$0xff]
        %v349 = vld [vmem:[%s328 + $0x8] sm:$0xff]
        %v350 = vpack.c.bf16 %v349, %v348
        %v351 = vld [vmem:[%s291] sm:$0xf]
        %v352 = vld [vmem:[%s291 + $0x4] sm:$0xf]
        %v353 = vld [vmem:[%s291 + $0x8] sm:$0xf]
        %v354 = vld [vmem:[%s291 + $0xc] sm:$0xf]
        %v355 = vld [vmem:[%s332] sm:$0x1]
        %v357 = vlaneseq
        %v358 = vshrl.u32 %v357, 7
        %v359 = vsub.s32 0, %v358
        %v360 = vrot.slane %v355, %v359
        %v366 = vunpack.c.l.b16 %v351
        %v367 = vunpack.c.l.b16 %v352
        %v368 = vunpack.c.l.b16 %v353
        %v369 = vunpack.c.l.b16 %v354
        %v370 = vpack.c.b16 %v367, %v366
        %v371 = vpack.c.b16 %v369, %v368
        %vm374 = vcmask 261120
        %v376 = vsel %vm374, %v350, 0
        %378 = vmatprep.subr.bf16.mxu0 0
        %379 = vmatpush1.bf16.msra.mxu0 %v370
        %380 = vmatprep.subr.bf16.mxu0 0
        %381 = vmatpush1.bf16.msra.mxu0 %v371
        %382 = vmatprep.subr.bf16.mxu0 0
        %383 = vmatpush1.bf16.msra.mxu0 0
        %384 = vmatprep.subr.bf16.mxu0 0
        %385 = vmatpush1.bf16.msra.mxu0 0
        %386 = vmatprep.subr.bf16.mxu0 0
        %387 = vmatpush1.bf16.msra.mxu0 0
        %388 = vmatprep.subr.bf16.mxu0 0
        %389 = vmatpush1.bf16.msra.mxu0 0
        %390 = vmatprep.subr.bf16.mxu0 0
        %391 = vmatpush1.bf16.msra.mxu0 0
        %392 = vmatprep.subr.bf16.mxu0 0
        %393 = vmatpush1.bf16.msra.mxu0 0
        %394 = vmatprep.subr.bf16.mxu0 0
        %395 = vmatpush1.bf16.msra.mxu0 0
        %396 = vmatprep.subr.bf16.mxu0 0
        %397 = vmatpush1.bf16.msra.mxu0 0
        %398 = vmatprep.subr.bf16.mxu0 0
        %399 = vmatpush1.bf16.msra.mxu0 0
        %400 = vmatprep.subr.bf16.mxu0 0
        %401 = vmatpush1.bf16.msra.mxu0 0
        %402 = vmatprep.subr.bf16.mxu0 0
        %403 = vmatpush1.bf16.msra.mxu0 0
        %404 = vmatprep.subr.bf16.mxu0 0
        %405 = vmatpush1.bf16.msra.mxu0 0
        %406 = vmatprep.subr.bf16.mxu0 0
        %407 = vmatpush1.bf16.msra.mxu0 0
        %408 = vmatprep.subr.bf16.mxu0 0
        %409 = vmatpush1.bf16.msra.mxu0 0
        %410 = vmatprep.mubr.bf16.mxu0 0
        %411 = vmatmul.mubr.bf16.gmra.mrb[0].mxu0 %v376
        %v412 = vpop.f32.mrb[0].mxu0
        %v413 = vadd.f32 %v360, %v412
        %v414 = vpop.f32.mrb[0].mxu0
        %v415 = vpop.f32.mrb[0].mxu0
        %v416 = vadd.f32 %v360, %v415
        %v417 = vpop.f32.mrb[0].mxu0
        %418 = vdwg.mxu0
        %v419 = vmul.f32 %v413, 0.5
        %v420 = vmul.f32 %v416, 0.5
        %v421 = vmul.f32 %v413, 0.044715
        %v422 = vmul.f32 %v416, 0.044715
        %v423 = vmul.f32 %v421, %v413
        %v424 = vmul.f32 %v422, %v416
        %v425 = vmul.f32 %v423, %v413
        %v426 = vmul.f32 %v424, %v416
        %v427 = vadd.f32 %v413, %v425
        %v428 = vadd.f32 %v416, %v426
        %v429 = vmul.f32 %v427, 0.7978846
        %v430 = vmul.f32 %v428, 0.7978846
        %v431 = vtanh.pop %v429
        %v432 = vtanh.pop %v430
        %v433 = vadd.f32 %v431, 1.0
        %v434 = vadd.f32 %v432, 1.0
        %v435 = vmul.f32 %v419, %v433
        %v436 = vmul.f32 %v420, %v434
        %v437 = vld [vmem:[#allocation2] sm:$0xff]
        %v438 = vld [vmem:[#allocation2 + $0x8] sm:$0xff]
        %v439 = vpack.c.bf16 %v436, %v435
        %v440 = vld [vmem:[%s337] sm:$0xf]
        %v441 = vld [vmem:[%s337 + $0x4] sm:$0xf]
        %v442 = vld [vmem:[%s337 + $0x8] sm:$0xf]
        %v443 = vld [vmem:[%s337 + $0xc] sm:$0xf]
        %v444 = vld [vmem:[%s337 + $0x10] sm:$0xf]
        %v445 = vld [vmem:[%s337 + $0x14] sm:$0xf]
        %v446 = vld [vmem:[%s337 + $0x18] sm:$0xf]
        %v447 = vld [vmem:[%s337 + $0x1c] sm:$0xf]
        %v448 = vld [vmem:[%s337 + $0x20] sm:$0xf]
        %v449 = vld [vmem:[%s337 + $0x24] sm:$0xf]
        %v450 = vld [vmem:[%s337 + $0x28] sm:$0xf]
        %v451 = vld [vmem:[%s337 + $0x2c] sm:$0xf]
        %v452 = vld [vmem:[%s337 + $0x30] sm:$0xf]
        %v453 = vld [vmem:[%s337 + $0x34] sm:$0xf]
        %v454 = vld [vmem:[%s337 + $0x38] sm:$0xf]
        %v455 = vld [vmem:[%s337 + $0x3c] sm:$0xf]
        %v472 = vunpack.c.l.b16 %v440
        %v473 = vunpack.c.l.b16 %v441
        %v474 = vunpack.c.l.b16 %v442
        %v475 = vunpack.c.l.b16 %v443
        %v476 = vunpack.c.l.b16 %v444
        %v477 = vunpack.c.l.b16 %v445
        %v478 = vunpack.c.l.b16 %v446
        %v479 = vunpack.c.l.b16 %v447
        %v480 = vunpack.c.l.b16 %v448
        %v481 = vunpack.c.l.b16 %v449
        %v482 = vunpack.c.l.b16 %v450
        %v483 = vunpack.c.l.b16 %v451
        %v484 = vunpack.c.l.b16 %v452
        %v485 = vunpack.c.l.b16 %v453
        %v486 = vunpack.c.l.b16 %v454
        %v487 = vunpack.c.l.b16 %v455
        %v488 = vpack.c.b16 %v473, %v472
        %v489 = vpack.c.b16 %v475, %v474
        %v490 = vpack.c.b16 %v477, %v476
        %v491 = vpack.c.b16 %v479, %v478
        %v492 = vpack.c.b16 %v481, %v480
        %v493 = vpack.c.b16 %v483, %v482
        %v494 = vpack.c.b16 %v485, %v484
        %v495 = vpack.c.b16 %v487, %v486
        %504 = vmatprep.subr.bf16.mxu0 0
        %505 = vmatpush1.bf16.msra.mxu0 %v488
        %506 = vmatprep.subr.bf16.mxu0 0
        %507 = vmatpush1.bf16.msra.mxu0 %v489
        %508 = vmatprep.subr.bf16.mxu0 0
        %509 = vmatpush1.bf16.msra.mxu0 %v490
        %510 = vmatprep.subr.bf16.mxu0 0
        %511 = vmatpush1.bf16.msra.mxu0 %v491
        %512 = vmatprep.subr.bf16.mxu0 0
        %513 = vmatpush1.bf16.msra.mxu0 %v492
        %514 = vmatprep.subr.bf16.mxu0 0
        %515 = vmatpush1.bf16.msra.mxu0 %v493
        %516 = vmatprep.subr.bf16.mxu0 0
        %517 = vmatpush1.bf16.msra.mxu0 %v494
        %518 = vmatprep.subr.bf16.mxu0 0
        %519 = vmatpush1.bf16.msra.mxu0 %v495
        %520 = vmatprep.subr.bf16.mxu0 0
        %521 = vmatpush1.bf16.msra.mxu0 0
        %522 = vmatprep.subr.bf16.mxu0 0
        %523 = vmatpush1.bf16.msra.mxu0 0
        %524 = vmatprep.subr.bf16.mxu0 0
        %525 = vmatpush1.bf16.msra.mxu0 0
        %526 = vmatprep.subr.bf16.mxu0 0
        %527 = vmatpush1.bf16.msra.mxu0 0
        %528 = vmatprep.subr.bf16.mxu0 0
        %529 = vmatpush1.bf16.msra.mxu0 0
        %530 = vmatprep.subr.bf16.mxu0 0
        %531 = vmatpush1.bf16.msra.mxu0 0
        %532 = vmatprep.subr.bf16.mxu0 0
        %533 = vmatpush1.bf16.msra.mxu0 0
        %534 = vmatprep.subr.bf16.mxu0 0
        %535 = vmatpush1.bf16.msra.mxu0 0
        %536 = vmatprep.mubr.bf16.mxu0 0
        %537 = vmatmul.mubr.bf16.gmra.mrb[0].mxu0 %v439
        %v538 = vpop.f32.mrb[0].mxu0
        %v539 = vadd.f32 0.0, %v538
        %v540 = vpop.f32.mrb[0].mxu0
        %v541 = vpop.f32.mrb[0].mxu0
        %v542 = vadd.f32 0.0, %v541
        %v543 = vpop.f32.mrb[0].mxu0
        %544 = vdwg.mxu0
        %v545 = vadd.f32 %v437, %v539
        %v546 = vadd.f32 %v438, %v542
        %547 = vst.msk [vmem:[#allocation2] sm:$0xff] %vm374, %v545
        %548 = vst.msk [vmem:[#allocation2 + $0x8] sm:$0xff] %vm374, %v546
        %p549 = scmp.eq.s32.totalorder %s22, 1
        // Predicated region
        $region86: #{tpu_custom_call.1} parent=76 // pred_check
          %p550 = pneg %p549
        $region87: #{tpu_custom_call.1} parent=76 // pred_check_branch
          %552 = sbr.rel (%p550) target = $region89
        $region88: #{tpu_custom_call.1} parent=76 // pred_region
          %v553 = vld [vmem:[#allocation2] sm:$0xff]
          %v554 = vld [vmem:[#allocation2 + $0x8] sm:$0xff]
          %v555 = vld [vmem:[%s4] sm:$0x1]
          %v557 = vlaneseq
          %v558 = vshrl.u32 %v557, 7
          %v559 = vsub.s32 0, %v558
          %v560 = vrot.slane %v555, %v559
          %v562 = vadd.f32 %v553, %v560
          %v563 = vadd.f32 %v554, %v560
          %564 = vst.msk [vmem:[#allocation4] sm:$0xff] %vm374, %v562
          %565 = vst.msk [vmem:[#allocation4 + $0x8] sm:$0xff] %vm374, %v563
        $region89: #{tpu_custom_call.1} parent=76 // pred_fallthru
          _
        // Predicated region
        $region90: #{tpu_custom_call.1} parent=76 // pred_check
          %p566 = pneg %p172
        $region91: #{tpu_custom_call.1} parent=76 // pred_check_branch
          %568 = sbr.rel (%p566) target = $region93
        $region92: #{tpu_custom_call.1} parent=76 // pred_region
          %s569 = smul.u32 2, %s21
          %s571 = ssub.s32 256, 256
          %572 = vsyncadd [#allocation5], %s571
          %s573 = smul.addr %s569, 128
          %s574 = scalar_lea.hbm %s5, %s573
          %s575 = sshll.u32 [#allocation4], 4
          %s576 = int_to_ptr.vmem [resolvable:$true] %s575
          %581 = dma.vmem_to_hbm [thread:$0]  %s576, 256, %s574, [#allocation5], 128, 128, 8
        $region93: #{tpu_custom_call.1} parent=76 // pred_fallthru
          _
        // Predicated region
        $region94: #{tpu_custom_call.1} parent=76 // pred_check
          %p582 = pneg %p172
        $region95: #{tpu_custom_call.1} parent=76 // pred_check_branch
          %584 = sbr.rel (%p582) target = $region97
        $region96: #{tpu_custom_call.1} parent=76 // pred_region
          %585 = dma.done [#allocation5], 256
        $region97: #{tpu_custom_call.1} parent=76 // pred_fallthru
          _
      $region77: #{tpu_custom_call.1} parent=5 // pred_fallthru
        _
      %p586 = scmp.le.s32.totalorder 2, %s12
      // Predicated region
      $region98: #{tpu_custom_call.1} parent=5 // pred_check
        %p587 = pneg %p586
      $region99: #{tpu_custom_call.1} parent=5 // pred_check_branch
        %589 = sbr.rel (%p587) target = $region101
      $region100: #{tpu_custom_call.1} parent=5 // pred_region
        %s590 = ssub.s32 %s12, 2
      $region101: #{tpu_custom_call.1} parent=5 // pred_fallthru
        _
    $region6: #{tpu_custom_call.1} parent=1 // loop_footer
      %s16 = sadd.s32 1, %s12
    $region7: #{tpu_custom_call.1} parent=1 // loop_footer_branch
      %11 = sbr.rel target = $region3
    $region8: #{tpu_custom_call.1} parent=1 // loop_exit
      _
    %591 = vsyncpa [#allocation5], 1
    %s592 = scalar_lea.sflag [#allocation5], 1
    %593 = vsyncpa %s592, 1

</llo_original>
